<compile_context>
chip_gen: v7x
topology: tpu7x:2x2x1
jax: 0.10.0
libtpu: 0.0.40
codegen_flags: <defaults>
</compile_context>

<pallas_src>
import functools

import jax
import jax.numpy as jnp
from jax.experimental import pallas as pl
from jax.experimental.pallas import tpu as pltpu


_LANE = 128
_TARGET_TILE_PIXELS = 8192   # per-step pixels target (review: 4096-8192)
_MIN_PARALLEL_STEPS = 4      # keep >= a few grid steps so v7x's 2 TCs both get work


# ---------------------------------------------------------------------------
# Pallas kernel: out[b] = W_fold(Cout,Cin) @ x[b](Cin,TP) + shift(Cout,1)
# ---------------------------------------------------------------------------
def _conv1x1_bn_kernel(w_ref, shift_ref, x_ref, o_ref):
    # w_ref:     (Cout, Cin)     folded weight (conv W * bn scale), compute dtype
    # shift_ref: (Cout, 1)       f32 folded shift ((b - mean)*scale + beta)
    # x_ref:     (NB, Cin, TP)   NB batch items, one pixel tile
    # o_ref:     (NB, Cout, TP)
    w = w_ref[...]
    shift = shift_ref[...]
    nb = x_ref.shape[0]
    for b in range(nb):  # static unroll; NB is a compile-time block size
        y = jnp.dot(w, x_ref[b], preferred_element_type=jnp.float32)
        o_ref[b] = (y + shift).astype(o_ref.dtype)


# ---------------------------------------------------------------------------
# Generation-aware tiling.
# ---------------------------------------------------------------------------
def _vmem_budget_bytes():
    phys = 64 * 1024 * 1024  # assume the smallest generation (v7x) if unknown
    get_info = getattr(pltpu, "get_tpu_info", None)
    if get_info is not None:
        try:
            phys = int(getattr(get_info(), "vmem_capacity_bytes", phys))
        except Exception:
            pass
    # Leave headroom for compiler internals / semaphores / resident weights.
    return min(int(phys * 0.70), 96 * 1024 * 1024)


def _select_tiling(n, cin, cout, p, itemsize, budget):
    """Pick (nb, tp): batch items and pixels processed per grid step."""
    per_pixel = 2 * (cin + cout) * itemsize            # double-buffered in + out
    budget_pixels = max(budget // per_pixel, _LANE)

    if p <= budget_pixels:
        # Whole pixel axis in one tile; pack batch items to amortize step cost,
        # but keep at least a few grid steps for megacore sharding (v7x).
        tp = p
        nb = max(1, min(n, budget_pixels // max(p, 1)))
        min_steps = min(n, _MIN_PARALLEL_STEPS)
        nb = max(1, min(nb, n // min_steps))
    else:
        nb = 1
        tp = min(_TARGET_TILE_PIXELS, budget_pixels)
        tp = max((tp // _LANE) * _LANE, _LANE)
        # Ensure the grid has enough total steps (v7x has 2 TensorCores).
        while tp > _LANE and n * pl.cdiv(p, tp) < _MIN_PARALLEL_STEPS:
            tp = max(((tp // 2) // _LANE) * _LANE, _LANE)
    return nb, tp


def _conv1x1_bn_pallas(w_fold, shift, x3):
    """w_fold: (Cout, Cin); shift: (Cout, 1) f32; x3: (N, Cin, P) -> (N, Cout, P)."""
    n, cin, p = x3.shape
    cout = w_fold.shape[0]
    itemsize = jnp.dtype(x3.dtype).itemsize

    budget = _vmem_budget_bytes()
    nb, tp = _select_tiling(n, cin, cout, p, itemsize, budget)
    grid = (pl.cdiv(n, nb), pl.cdiv(p, tp))

    # Scoped-VMEM limit derived from the actual (double-buffered) tile footprint.
    tile_bytes = 2 * nb * (cin + cout) * tp * itemsize
    weight_bytes = 2 * (cout * cin * itemsize + cout * 4)
    vmem_limit = int(min(budget,
                         max(16 * 1024 * 1024,
                             int(1.5 * (tile_bytes + weight_bytes)) + (4 << 20))))

    return pl.pallas_call(
        _conv1x1_bn_kernel,
        out_shape=jax.ShapeDtypeStruct((n, cout, p), x3.dtype),
        grid_spec=pltpu.PrefetchScalarGridSpec(
            num_scalar_prefetch=0,
            grid=grid,
            in_specs=[
                pl.BlockSpec((cout, cin), lambda b, j: (0, 0)),   # weight (resident)
                pl.BlockSpec((cout, 1), lambda b, j: (0, 0)),     # shift  (resident)
                pl.BlockSpec((nb, cin, tp), lambda b, j: (b, 0, j)),
            ],
            out_specs=pl.BlockSpec((nb, cout, tp), lambda b, j: (b, 0, j)),
        ),
        compiler_params=pltpu.CompilerParams(
            dimension_semantics=("parallel", "parallel"),
            vmem_limit_bytes=vmem_limit,
        ),
    )(w_fold, shift, x3)


# ---------------------------------------------------------------------------
# Module-level wrapper (glue in plain JAX).
# ---------------------------------------------------------------------------
@functools.partial(jax.jit, static_argnames=("stride", "use_bn"))
def single_conv_block(x_nchw, params, *, stride, use_bn=True, eps=1e-5):
    """Forward pass of SingleConvBlock (inference BN). NCHW in -> NCHW out."""
    w = params["conv_w"]          # (Cout, Cin, 1, 1)
    b = params["conv_b"]          # (Cout,)
    cout, cin = w.shape[0], w.shape[1]

    # Compute/IO dtype follows the activation dtype (bf16 stays bf16 end-to-end).
    if x_nchw.dtype in (jnp.bfloat16, jnp.float32):
        compute_dtype = x_nchw.dtype
    else:
        compute_dtype = jnp.float32
        x_nchw = x_nchw.astype(compute_dtype)

    # 1x1 conv with stride == strided spatial subsampling + channel matmul.
    # TODO(synk): fold the stride into the kernel's BlockSpec/DMA to drop this pass.
    if stride > 1:
        x_nchw = x_nchw[:, :, ::stride, ::stride]
    n, _, ho, wo = x_nchw.shape
    x3 = x_nchw.reshape(n, cin, ho * wo)               # zero-copy for stride==1

    # Fold conv bias + BN affine into the weight and one per-channel shift (f32).
    w2 = w.reshape(cout, cin).astype(jnp.float32)
    b32 = b.astype(jnp.float32)
    if use_bn:
        scale = params["bn_gamma"].astype(jnp.float32) / jnp.sqrt(
            params["bn_running_var"].astype(jnp.float32) + eps)
        w_fold = w2 * scale[:, None]
        shift = (b32 - params["bn_running_mean"].astype(jnp.float32)) * scale \
            + params["bn_beta"].astype(jnp.float32)
    else:
        w_fold = w2
        shift = b32
    w_fold = w_fold.astype(compute_dtype)
    shift = shift.reshape(cout, 1)                     # stays f32 (v5e VPU has no bf16)

    y3 = _conv1x1_bn_pallas(w_fold, shift, x3)         # (N, Cout, Ho*Wo)
    return y3.reshape(n, cout, ho, wo)                 # already NCHW


# ---------------------------------------------------------------------------
# Deterministic parameter init + reference check.
# ---------------------------------------------------------------------------
def make_params(key, in_features, out_features):
    k1, k2, k3, k4, k5, k6 = jax.random.split(key, 6)
    return {
        "conv_w": 0.1 * jax.random.normal(
            k1, (out_features, in_features, 1, 1), jnp.float32),
        "conv_b": 0.1 * jax.random.normal(k2, (out_features,), jnp.float32),
        "bn_gamma": 1.0 + 0.1 * jax.random.normal(
            k3, (out_features,), jnp.float32),
        "bn_beta": 0.1 * jax.random.normal(k4, (out_features,), jnp.float32),
        "bn_running_mean": 0.05 * jax.random.normal(
            k5, (out_features,), jnp.float32),
        "bn_running_var": 1.0 + 0.1 * jnp.abs(
            jax.random.normal(k6, (out_features,), jnp.float32)),
    }


def reference_forward(x_nchw, params, *, stride, use_bn=True, eps=1e-5):
    w = params["conv_w"]
    b = params["conv_b"]
    y = jax.lax.conv_general_dilated(
        x_nchw, w, window_strides=(stride, stride), padding="VALID",
        dimension_numbers=("NCHW", "OIHW", "NCHW"))
    y = y + b.reshape(1, -1, 1, 1)
    if use_bn:
        scale = params["bn_gamma"] / jnp.sqrt(params["bn_running_var"] + eps)
        shift = params["bn_beta"] - params["bn_running_mean"] * scale
        y = y * scale.reshape(1, -1, 1, 1) + shift.reshape(1, -1, 1, 1)
    return y


if __name__ == "__main__":
    key = jax.random.PRNGKey(0)
    kx, kp = jax.random.split(key)

    N, CIN, COUT, H, W, STRIDE = 2, 4, 8, 16, 16, 2
    x = jax.random.normal(kx, (N, CIN, H, W), jnp.float32)
    params = make_params(kp, CIN, COUT)

    # stride=2 with BN (the DexiNed skip-connection configuration)
    out = single_conv_block(x, params, stride=STRIDE, use_bn=True)
    out = jax.block_until_ready(out)
    ref = reference_forward(x, params, stride=STRIDE, use_bn=True)
    assert out.shape == (N, COUT, H // STRIDE, W // STRIDE)
    assert jnp.allclose(out, ref, atol=1e-4, rtol=1e-4)

    # stride=1, no BN
    out1 = jax.block_until_ready(single_conv_block(x, params, stride=1, use_bn=False))
    ref1 = reference_forward(x, params, stride=1, use_bn=False)
    assert out1.shape == (N, COUT, H, W)
    assert jnp.allclose(out1, ref1, atol=1e-4, rtol=1e-4)

    # bf16 activations pass straight through (bf16 in -> bf16 out, f32 accumulate)
    xb = x.astype(jnp.bfloat16)
    outb = jax.block_until_ready(single_conv_block(xb, params, stride=1, use_bn=True))
    refb = reference_forward(x, params, stride=1, use_bn=True)
    assert outb.dtype == jnp.bfloat16
    assert jnp.allclose(outb.astype(jnp.float32), refb, atol=5e-2, rtol=5e-2)

    print("KERNEL_OK")
</pallas_src>

<mosaic_0001>
module attributes {stable_mosaic.version = 11 : i64} {
  func.func @_conv1x1_bn_kernel(%arg0: i32, %arg1: i32, %arg2: memref<8x4xf32, #tpu.memory_space<vmem>>, %arg3: memref<8x1xf32, #tpu.memory_space<vmem>>, %arg4: memref<1x4x64xf32, #tpu.memory_space<vmem>>, %arg5: memref<1x8x64xf32, #tpu.memory_space<vmem>>) attributes {dimension_semantics = [#tpu.dimension_semantics<parallel>, #tpu.dimension_semantics<parallel>], iteration_bounds = array<i64: 2, 1>, scalar_prefetch = 0 : i64, scratch_operands = 0 : i64, tpu.core_type = #tpu.core_type<tc>, window_params = [{pipeline_mode = #tpu.pipeline_mode<synchronous>, transform_indices = @transform_0, window_bounds = array<i64: 8, 4>}, {pipeline_mode = #tpu.pipeline_mode<synchronous>, transform_indices = @transform_1, window_bounds = array<i64: 8, 1>}, {transform_indices = @transform_2, window_bounds = array<i64: 1, 4, 64>}, {transform_indices = @transform_3, window_bounds = array<i64: 1, 8, 64>}]} {
    %c0 = arith.constant 0 : index
    %c0_0 = arith.constant 0 : index
    %0 = vector.load %arg2[%c0, %c0_0] : memref<8x4xf32, #tpu.memory_space<vmem>>, vector<8x4xf32>
    %c0_1 = arith.constant 0 : index
    %c0_2 = arith.constant 0 : index
    %1 = vector.load %arg3[%c0_1, %c0_2] : memref<8x1xf32, #tpu.memory_space<vmem>>, vector<8x1xf32>
    %c0_3 = arith.constant 0 : index
    %c0_4 = arith.constant 0 : index
    %c0_5 = arith.constant 0 : index
    %2 = vector.load %arg4[%c0_3, %c0_4, %c0_5] : memref<1x4x64xf32, #tpu.memory_space<vmem>>, vector<1x4x64xf32>
    %3 = vector.shape_cast %2 : vector<1x4x64xf32> to vector<4x64xf32>
    %cst = arith.constant dense<0.000000e+00> : vector<8x64xf32>
    %4 = tpu.matmul %0, %3, %cst {dimension_numbers = #tpu.dot_dimension_numbers<[1], [0], [0], [1], [0, 0, 1, 1], [], []>} : vector<8x4xf32>, vector<4x64xf32>, vector<8x64xf32> -> vector<8x64xf32>
    %5 = vector.broadcast %1 : vector<8x1xf32> to vector<8x64xf32>
    %6 = arith.addf %4, %5 : vector<8x64xf32>
    %c0_6 = arith.constant 0 : index
    %c0_7 = arith.constant 0 : index
    %c0_8 = arith.constant 0 : index
    %7 = vector.load %arg5[%c0_6, %c0_7, %c0_8] : memref<1x8x64xf32, #tpu.memory_space<vmem>>, vector<1x8x64xf32>
    %8 = vector.shape_cast %7 : vector<1x8x64xf32> to vector<8x64xf32>
    %9 = vector.shape_cast %6 : vector<8x64xf32> to vector<1x8x64xf32>
    tpu.vector_store %arg5[%c0_6, %c0_7, %c0_8], %9 {strides = array<i32>} : memref<1x8x64xf32, #tpu.memory_space<vmem>>, vector<1x8x64xf32>,
    return
  }
  func.func @transform_0(%arg0: i32, %arg1: i32) -> (i32, i32) {
    %c0_i32 = arith.constant 0 : i32
    %c0_i32_0 = arith.constant 0 : i32
    %c0_i32_1 = arith.constant 0 : i32
    return %c0_i32, %c0_i32_0 : i32, i32
  }
  func.func @transform_1(%arg0: i32, %arg1: i32) -> (i32, i32) {
    %c0_i32 = arith.constant 0 : i32
    %c0_i32_0 = arith.constant 0 : i32
    %c0_i32_1 = arith.constant 0 : i32
    return %c0_i32, %c0_i32_0 : i32, i32
  }
  func.func @transform_2(%arg0: i32, %arg1: i32) -> (i32, i32, i32) {
    %c0_i32 = arith.constant 0 : i32
    %c0_i32_0 = arith.constant 0 : i32
    return %arg0, %c0_i32, %arg1 : i32, i32, i32
  }
  func.func @transform_3(%arg0: i32, %arg1: i32) -> (i32, i32, i32) {
    %c0_i32 = arith.constant 0 : i32
    %c0_i32_0 = arith.constant 0 : i32
    return %arg0, %c0_i32, %arg1 : i32, i32, i32
  }
}

</mosaic_0001>

<llo_original>
// kernel: single_conv_block.1
$region0: #{single_conv_block.1}
  #allocation0 [shape = 'u32[]', space=smem, size = 0x4, offset = 0x4, fixed_abs, tag = 'smem constant byte address 0x4 - core index']
  #allocation1 [shape = 'u32[144,128]{1,0:T(1,128)}', space=vmem, size = 0x12000, scoped, tag = 'internal scratch']
  %s0 = inlined_call_operand.vmem [shape: f32[8,4], index: 0, kind: input, shape index: {}]
  %s1 = inlined_call_operand.vmem [shape: f32[8,1], index: 1, kind: input, shape index: {}]
  %s2 = inlined_call_operand.vmem [shape: f32[2,4,64], index: 2, kind: input, shape index: {}]
  %s3 = inlined_call_operand.vmem [shape: f32[2,8,64], index: 3, kind: output, shape index: {}]
  %s4 = sld [smem:[#allocation0]]
  $region45: #{single_conv_block.1} parent=0
    _
  %s6 = ssub.s32 1, %s4
  %s7 = scalar_select 0, %s6, %s4
  loop: start=0, step=1, limit=4
  $region2: #{single_conv_block.1} parent=0 // loop_pre_header
    _
  $region3: #{single_conv_block.1} parent=0 // loop_header
    %s9 = sphi 0, %s13
    %p10 = scmp.ge.s32.totalorder %s9, 4
    %s16 = sphi 0, %s28
    %s17 = sphi 0, %s24
    %s18 = sphi 0, %s16
    %s19 = sphi 0, %s17
    %s20 = sphi 0, %s18
    %s21 = sphi 0, %s19
    %s29 = sphi 0, %s29
    %s31 = sphi 0, %s29
    %s32 = sphi 0, %s31
    %s46 = sphi 0, %s32
    %s50 = sphi 0, %s50
    %s52 = sphi 0, %s50
    %s53 = sphi 0, %s52
    %s67 = sphi 0, %s53
    %s75 = sphi 0, %s77
    %s78 = sphi 0, %s75
    %s79 = sphi 0, %s78
    %s95 = sphi 0, %s79
    %s103 = sphi 0, %s105
    %s106 = sphi 0, %s103
    %s107 = sphi 0, %s106
    %s123 = sphi 0, %s107
  $region4: #{single_conv_block.1} parent=0 // loop_header_branch
    %12 = sbr.rel (%p10) target = $region8
  $region5: #{single_conv_block.1} parent=0 // loop_body
    %s14 = ssub.s32 %s9, 1
    %s15 = ssub.s32 %s9, 2
    %s22 = sadd.s32 1, %s17
    %p23 = scmp.ge.s32.totalorder %s22, 1
    %s24 = scalar_select %p23, 0, %s22
    %s25 = sadd.s32 1, %s16
    %s26 = scalar_select %p23, %s25, %s16
    %p27 = scmp.ge.s32.totalorder %s26, 2
    %s28 = scalar_select %p27, 0, %s26
    %s30 = sadd.s32 %s29, 1
    %p33 = scmp.eq.s32.totalorder %s9, 1
    %p34 = scmp.ne.s32.totalorder %s29, %s31
    %p35 = scmp.eq.s32.totalorder %s9, 0
    %p36 = por %p34, %p35
    %p37 = scmp.ne.s32.totalorder %s29, %s31
    %p38 = scmp.eq.s32.totalorder %s14, 1
    %p39 = por %p37, %p38
    %p40 = scmp.ne.s32.totalorder %s31, %s32
    %p41 = scmp.eq.s32.totalorder %s14, 0
    %p42 = por %p40, %p41
    %p43 = scmp.ne.s32.totalorder %s31, %s32
    %p44 = scmp.eq.s32.totalorder %s15, 1
    %p45 = por %p43, %p44
    %p47 = scmp.ne.s32.totalorder %s32, %s46
    %p48 = scmp.eq.s32.totalorder %s15, 0
    %p49 = por %p47, %p48
    %s51 = sadd.s32 %s50, 1
    %p54 = scmp.eq.s32.totalorder %s9, 1
    %p55 = scmp.ne.s32.totalorder %s50, %s52
    %p56 = scmp.eq.s32.totalorder %s9, 0
    %p57 = por %p55, %p56
    %p58 = scmp.ne.s32.totalorder %s50, %s52
    %p59 = scmp.eq.s32.totalorder %s14, 1
    %p60 = por %p58, %p59
    %p61 = scmp.ne.s32.totalorder %s52, %s53
    %p62 = scmp.eq.s32.totalorder %s14, 0
    %p63 = por %p61, %p62
    %p64 = scmp.ne.s32.totalorder %s52, %s53
    %p65 = scmp.eq.s32.totalorder %s15, 1
    %p66 = por %p64, %p65
    %p68 = scmp.ne.s32.totalorder %s53, %s67
    %p69 = scmp.eq.s32.totalorder %s15, 0
    %p70 = por %p68, %p69
    %s71 = ssub.s32 %s16, %s28
    %s72 = ssub.s32 %s17, %s24
    %s73 = sor.u32 %s71, %s72
    %p74 = scmp.eq.s32.totalorder %s73, 0
    %s76 = sadd.s32 %s75, 1
    %s77 = scalar_select %p74, %s75, %s76
    %p80 = pneg %p74
    %p81 = scmp.eq.s32.totalorder %s9, 1
    %p82 = por %p80, %p81
    %p83 = scmp.ne.s32.totalorder %s75, %s78
    %p84 = scmp.eq.s32.totalorder %s9, 0
    %p85 = por %p83, %p84
    %p86 = scmp.ne.s32.totalorder %s75, %s78
    %p87 = scmp.eq.s32.totalorder %s14, 1
    %p88 = por %p86, %p87
    %p89 = scmp.ne.s32.totalorder %s78, %s79
    %p90 = scmp.eq.s32.totalorder %s14, 0
    %p91 = por %p89, %p90
    %p92 = scmp.ne.s32.totalorder %s78, %s79
    %p93 = scmp.eq.s32.totalorder %s15, 1
    %p94 = por %p92, %p93
    %p96 = scmp.ne.s32.totalorder %s79, %s95
    %p97 = scmp.eq.s32.totalorder %s15, 0
    %p98 = por %p96, %p97
    %s99 = ssub.s32 %s16, %s28
    %s100 = ssub.s32 %s17, %s24
    %s101 = sor.u32 %s99, %s100
    %p102 = scmp.eq.s32.totalorder %s101, 0
    %s104 = sadd.s32 %s103, 1
    %s105 = scalar_select %p102, %s103, %s104
    %p108 = pneg %p102
    %p109 = scmp.eq.s32.totalorder %s9, 1
    %p110 = por %p108, %p109
    %p111 = scmp.ne.s32.totalorder %s103, %s106
    %p112 = scmp.eq.s32.totalorder %s9, 0
    %p113 = por %p111, %p112
    %p114 = scmp.ne.s32.totalorder %s103, %s106
    %p115 = scmp.eq.s32.totalorder %s14, 1
    %p116 = por %p114, %p115
    %p117 = scmp.ne.s32.totalorder %s106, %s107
    %p118 = scmp.eq.s32.totalorder %s14, 0
    %p119 = por %p117, %p118
    %p120 = scmp.ne.s32.totalorder %s106, %s107
    %p121 = scmp.eq.s32.totalorder %s15, 1
    %p122 = por %p120, %p121
    %p124 = scmp.ne.s32.totalorder %s107, %s123
    %p125 = scmp.eq.s32.totalorder %s15, 0
    %p126 = por %p124, %p125
    %p127 = scmp.le.s32.totalorder 1, %s9
    %p128 = scmp.lt.s32.totalorder %s9, 3
    %p129 = pnand %p127, %p128
    %p130 = pneg %p129
    // Predicated region
    $region9: #{single_conv_block.1} parent=5 // pred_check
      _
    $region10: #{single_conv_block.1} parent=5 // pred_check_branch
      %132 = sbr.rel (%p129) target = $region12
    $region11: #{single_conv_block.1} parent=5 // pred_region
      %s133 = ssub.s32 %s9, 1
      // Predicated region
      $region13: #{single_conv_block.1} parent=11 // pred_check
        %p134 = pneg %p42
      $region14: #{single_conv_block.1} parent=11 // pred_check_branch
        %136 = sbr.rel (%p134) target = $region16
      $region15: #{single_conv_block.1} parent=11 // pred_region
        _
      $region16: #{single_conv_block.1} parent=11 // pred_fallthru
        _
      // Predicated region
      $region17: #{single_conv_block.1} parent=11 // pred_check
        %p137 = pneg %p63
      $region18: #{single_conv_block.1} parent=11 // pred_check_branch
        %139 = sbr.rel (%p137) target = $region20
      $region19: #{single_conv_block.1} parent=11 // pred_region
        _
      $region20: #{single_conv_block.1} parent=11 // pred_fallthru
        _
    $region12: #{single_conv_block.1} parent=5 // pred_fallthru
      _
    %p140 = scmp.lt.s32.totalorder %s9, 2
    // Predicated region
    $region21: #{single_conv_block.1} parent=5 // pred_check
      %p141 = pneg %p140
    $region22: #{single_conv_block.1} parent=5 // pred_check_branch
      %143 = sbr.rel (%p141) target = $region24
    $region23: #{single_conv_block.1} parent=5 // pred_region
      // Predicated region
      $region25: #{single_conv_block.1} parent=23 // pred_check
        %p144 = pneg %p85
      $region26: #{single_conv_block.1} parent=23 // pred_check_branch
        %146 = sbr.rel (%p144) target = $region28
      $region27: #{single_conv_block.1} parent=23 // pred_region
        %p147 = scmp.lt.s32.totalorder %s16, 1
        %s148 = scalar_select %p147, %s16, 1
        %p149 = scmp.lt.s32.totalorder %s17, 0
        %s150 = scalar_select %p149, %s17, 0
        %s151 = sadd.s32 %s150, %s148
        %s152 = smul.addr %s151, 4
        %s153 = scalar_lea.vmem %s2, %s152
      $region28: #{single_conv_block.1} parent=23 // pred_fallthru
        _
    $region24: #{single_conv_block.1} parent=5 // pred_fallthru
      _
    %p154 = scmp.le.s32.totalorder 1, %s9
    %p155 = scmp.lt.s32.totalorder %s9, 3
    %p156 = pnand %p154, %p155
    %p157 = pneg %p156
    // Predicated region
    $region29: #{single_conv_block.1} parent=5 // pred_check
      _
    $region30: #{single_conv_block.1} parent=5 // pred_check_branch
      %159 = sbr.rel (%p156) target = $region32
    $region31: #{single_conv_block.1} parent=5 // pred_region
      %s160 = ssub.s32 %s9, 1
      %p161 = pneg %p42
      %p162 = pneg %p39
      %p163 = pneg %p63
      %p164 = pneg %p60
      %p165 = scmp.lt.s32.totalorder %s18, 1
      %s166 = scalar_select %p165, %s18, 1
      %p167 = scmp.lt.s32.totalorder %s19, 0
      %s168 = scalar_select %p167, %s19, 0
      %s169 = sadd.s32 %s168, %s166
      %s170 = smul.addr %s169, 4
      %s171 = scalar_lea.vmem %s2, %s170
      %p172 = pneg %p91
      %p173 = pneg %p88
      %p174 = pneg %p119
      %p175 = pneg %p116
      %p176 = scmp.lt.s32.totalorder %s18, 1
      %s177 = scalar_select %p176, %s18, 1
      %p178 = scmp.lt.s32.totalorder %s19, 0
      %s179 = scalar_select %p178, %s19, 0
      %s180 = sadd.s32 %s179, %s177
      %s181 = smul.addr %s180, 8
      %s182 = scalar_lea.vmem %s3, %s181
      %p183 = scmp.lt.s32.totalorder %s18, 1
      %s184 = scalar_select %p183, %s18, 1
      %p185 = scmp.lt.s32.totalorder %s19, 0
      %s186 = scalar_select %p185, %s19, 0
      %s187 = sadd.s32 %s186, %s184
      %s188 = smul.addr %s187, 4
      %s189 = scalar_lea.vmem %s2, %s188
      %p190 = scmp.lt.s32.totalorder %s18, 1
      %s191 = scalar_select %p190, %s18, 1
      %p192 = scmp.lt.s32.totalorder %s19, 0
      %s193 = scalar_select %p192, %s19, 0
      %s194 = sadd.s32 %s193, %s191
      %s195 = smul.addr %s194, 8
      %s196 = scalar_lea.vmem %s3, %s195
      %v197 = vld [vmem:[%s0] sm:$0xff]
      %v198 = vld [vmem:[%s1] sm:$0xff]
      %v199 = vld [vmem:[%s189] sm:$0xf]
      %201 = vset.pattern.permute.xlu0 0
      %202 = vperm.xlu0 %201, %v198
      %v203 = vpop.permute.xlu0 %202
      %vm205 = vcmask 31744
      %v207 = vsel %vm205, %v197, 0
      %vm209 = vcmask 1043456
      %v211 = vsel %vm209, %v199, 0
      %213 = vmatprep.subr.mxu0 0.0
      %214 = vmatpush1.msra.mxu0 %v211
      %215 = vmatprep.subr.mxu0 0.0
      %216 = vmatpush1.msra.mxu0 0.0
      %217 = vmatprep.subr.mxu0 0.0
      %218 = vmatpush1.msra.mxu0 0.0
      %219 = vmatprep.subr.mxu0 0.0
      %220 = vmatpush1.msra.mxu0 0.0
      %221 = vmatprep.subr.mxu0 0.0
      %222 = vmatpush1.msra.mxu0 0.0
      %223 = vmatprep.subr.mxu0 0.0
      %224 = vmatpush1.msra.mxu0 0.0
      %225 = vmatprep.subr.mxu0 0.0
      %226 = vmatpush1.msra.mxu0 0.0
      %227 = vmatprep.subr.mxu0 0.0
      %228 = vmatpush1.msra.mxu0 0.0
      %229 = vmatprep.subr.mxu0 0.0
      %230 = vmatpush1.msra.mxu0 0.0
      %231 = vmatprep.subr.mxu0 0.0
      %232 = vmatpush1.msra.mxu0 0.0
      %233 = vmatprep.subr.mxu0 0.0
      %234 = vmatpush1.msra.mxu0 0.0
      %235 = vmatprep.subr.mxu0 0.0
      %236 = vmatpush1.msra.mxu0 0.0
      %237 = vmatprep.subr.mxu0 0.0
      %238 = vmatpush1.msra.mxu0 0.0
      %239 = vmatprep.subr.mxu0 0.0
      %240 = vmatpush1.msra.mxu0 0.0
      %241 = vmatprep.subr.mxu0 0.0
      %242 = vmatpush1.msra.mxu0 0.0
      %243 = vmatprep.subr.mxu0 0.0
      %244 = vmatpush1.msra.mxu0 0.0
      %245 = vmatprep.subr.mxu0 0.0
      %246 = vmatpush1.msra.mxu0 0.0
      %247 = vmatprep.subr.mxu0 0.0
      %248 = vmatpush1.msra.mxu0 0.0
      %249 = vmatprep.subr.mxu0 0.0
      %250 = vmatpush1.msra.mxu0 0.0
      %251 = vmatprep.subr.mxu0 0.0
      %252 = vmatpush1.msra.mxu0 0.0
      %253 = vmatprep.subr.mxu0 0.0
      %254 = vmatpush1.msra.mxu0 0.0
      %255 = vmatprep.subr.mxu0 0.0
      %256 = vmatpush1.msra.mxu0 0.0
      %257 = vmatprep.subr.mxu0 0.0
      %258 = vmatpush1.msra.mxu0 0.0
      %259 = vmatprep.subr.mxu0 0.0
      %260 = vmatpush1.msra.mxu0 0.0
      %261 = vmatprep.subr.mxu0 0.0
      %262 = vmatpush1.msra.mxu0 0.0
      %263 = vmatprep.subr.mxu0 0.0
      %264 = vmatpush1.msra.mxu0 0.0
      %265 = vmatprep.subr.mxu0 0.0
      %266 = vmatpush1.msra.mxu0 0.0
      %267 = vmatprep.subr.mxu0 0.0
      %268 = vmatpush1.msra.mxu0 0.0
      %269 = vmatprep.subr.mxu0 0.0
      %270 = vmatpush1.msra.mxu0 0.0
      %271 = vmatprep.subr.mxu0 0.0
      %272 = vmatpush1.msra.mxu0 0.0
      %273 = vmatprep.subr.mxu0 0.0
      %274 = vmatpush1.msra.mxu0 0.0
      %275 = vmatprep.subr.mxu0 0.0
      %276 = vmatpush1.msra.mxu0 0.0
      %277 = vmatprep.mubr.f32.mxu0 0.0
      %278 = vmatmul.mubr.f32.gmra.mrb[0].mxu0 %v207
      %v279 = vpop.f32.mrb[0].mxu0
      %v280 = vadd.f32 %v203, %v279
      %v281 = vpop.f32.mrb[0].mxu0
      %282 = vdwg.mxu0
      %vm283 = vcmask 523264
      %284 = vst.msk [vmem:[%s196] sm:$0xff] %vm283, %v280
      %p285 = scmp.lt.s32.totalorder %s18, 1
      %s286 = scalar_select %p285, %s18, 1
      %p287 = scmp.lt.s32.totalorder %s19, 0
      %s288 = scalar_select %p287, %s19, 0
      %s289 = sadd.s32 %s288, %s286
      %s290 = smul.addr %s289, 8
      %s291 = scalar_lea.vmem %s3, %s290
      // Predicated region
      $region33: #{single_conv_block.1} parent=31 // pred_check
        %p292 = pneg %p116
      $region34: #{single_conv_block.1} parent=31 // pred_check_branch
        %294 = sbr.rel (%p292) target = $region36
      $region35: #{single_conv_block.1} parent=31 // pred_region
        _
      $region36: #{single_conv_block.1} parent=31 // pred_fallthru
        _
    $region32: #{single_conv_block.1} parent=5 // pred_fallthru
      _
    %p295 = scmp.le.s32.totalorder 2, %s9
    // Predicated region
    $region37: #{single_conv_block.1} parent=5 // pred_check
      %p296 = pneg %p295
    $region38: #{single_conv_block.1} parent=5 // pred_check_branch
      %298 = sbr.rel (%p296) target = $region40
    $region39: #{single_conv_block.1} parent=5 // pred_region
      %s299 = ssub.s32 %s9, 2
      // Predicated region
      $region41: #{single_conv_block.1} parent=39 // pred_check
        %p300 = pneg %p122
      $region42: #{single_conv_block.1} parent=39 // pred_check_branch
        %302 = sbr.rel (%p300) target = $region44
      $region43: #{single_conv_block.1} parent=39 // pred_region
        %p303 = scmp.lt.s32.totalorder %s20, 1
        %s304 = scalar_select %p303, %s20, 1
        %p305 = scmp.lt.s32.totalorder %s21, 0
        %s306 = scalar_select %p305, %s21, 0
        %s307 = sadd.s32 %s306, %s304
        %s308 = smul.addr %s307, 8
        %s309 = scalar_lea.vmem %s3, %s308
      $region44: #{single_conv_block.1} parent=39 // pred_fallthru
        _
    $region40: #{single_conv_block.1} parent=5 // pred_fallthru
      _
  $region6: #{single_conv_block.1} parent=0 // loop_footer
    %s13 = sadd.s32 1, %s9
  $region7: #{single_conv_block.1} parent=0 // loop_footer_branch
    %8 = sbr.rel target = $region3
  $region8: #{single_conv_block.1} parent=0 // loop_exit
    _

</llo_original>
